<compile_context>
chip_gen: v7x
topology: tpu7x:2x2x1
jax: 0.10.0
libtpu: 0.0.40
codegen_flags: <defaults>
</compile_context>

<pallas_src>
import functools

import numpy as np

import jax
import jax.numpy as jnp
from jax import lax
from jax.experimental import pallas as pl
from jax.experimental.pallas import tpu as pltpu

# ----------------------------- model hyper-params --------------------------
NODE_DIMS = (128, 16)          # (scalar, vector) channels per node
EDGE_DIMS = (32, 1)            # (scalar, vector) channels per edge
N_ATOM_CONV = 1
N_RES_CONV = 3
CONV_N_MESSAGE = 3
CONV_N_FEEDFORWARD = 2
ATOM_VOCAB = 38 + 1            # len(AtomType) + 1, padding idx 0
RES_VOCAB = 20 + 1             # len(ResidueType) + 1, padding idx 0
SEQ_CLASSES = 21
INIT_MAX_DIST = 10.0

_VMEM_LIMIT_BYTES = 32 * 1024 * 1024     # safe on v5e/v6e/v7x


# ----------------------------- chip-conditional tiling ----------------------
def _num_tensorcores():
    try:
        d = jax.devices()[0]
        if d.platform != "tpu":
            return 1
        kind = d.device_kind.lower()
        if "v7" in kind or "v4" in kind:
            return 2
    except Exception:
        pass
    return 1


_NUM_TC = _num_tensorcores()
_MAX_TILE = 512 if _NUM_TC >= 2 else 1024


def _ceil_to(x, m):
    return ((x + m - 1) // m) * m


def _row_tiling(n):
    """Pick (tile_rows, padded_rows); 2 parallel steps only on 2-TC chips."""
    n8 = _ceil_to(max(int(n), 1), 8)
    if _NUM_TC >= 2:
        if n8 <= 2 * _MAX_TILE:
            n_pad = _ceil_to(n8, 16)
            tn = n_pad // 2                   # both v7x TensorCores busy
        else:
            tn = _MAX_TILE
            n_pad = _ceil_to(n8, tn)
    else:
        if n8 <= _MAX_TILE:
            tn, n_pad = n8, n8                # single big tile on v5e/v6e
        else:
            tn = _MAX_TILE
            n_pad = _ceil_to(n8, tn)
    return tn, n_pad


def _full_spec(a):
    nd = a.ndim
    return pl.BlockSpec(a.shape, lambda *_: (0,) * nd)


def _compiler_params():
    return pltpu.CompilerParams(dimension_semantics=("parallel",),
                                vmem_limit_bytes=_VMEM_LIMIT_BYTES)


# ----------------------------- in-kernel math helpers ------------------------
def _coord_sumsq(x, c):
    """x: (rows, 3*c) packed [x|y|z]; per-channel sum of squares (rows, c), f32.

    Uses a tiny 0/1 selector matmul (MXU) instead of odd-offset lane slices."""
    sq = (x * x).astype(jnp.float32)
    sel = (lax.broadcasted_iota(jnp.int32, (3 * c, c), 0) % c
           == lax.broadcasted_iota(jnp.int32, (3 * c, c), 1)).astype(jnp.float32)
    return jnp.dot(sq, sel, preferred_element_type=jnp.float32)


def _rep3(g, c):
    """g: (rows, c) -> (rows, 3*c) replicated per coordinate block."""
    sel = (lax.broadcasted_iota(jnp.int32, (c, 3 * c), 1) % c
           == lax.broadcasted_iota(jnp.int32, (c, 3 * c), 0)).astype(jnp.float32)
    return jnp.dot(g.astype(jnp.float32), sel, preferred_element_type=jnp.float32)


def _ln_scalar(s, g, b):
    mu = jnp.mean(s, axis=-1, keepdims=True)
    var = jnp.mean((s - mu) ** 2, axis=-1, keepdims=True)
    return (s - mu) * lax.rsqrt(var + 1e-5) * g + b


def _ln_vector(v, c):
    vnsq = jnp.maximum(_coord_sumsq(v, c), 1e-8)      # per-channel ||v||^2, clamped
    inv = lax.rsqrt(jnp.mean(vnsq, axis=-1, keepdims=True))
    return v * inv


# ----------------------------- Pallas kernel --------------------------------
def _chain_kernel(*refs, cfgs, has_rbf, pre_add_ln, residual, has_ln):
    """Fused chain: [RBF] -> [residual-add + LN0] -> GVP x L -> [residual] -> [LN].

    Scalars: (tn, si) tiles.  Vectors: lane-packed (tn, 3*vi) tiles [x|y|z];
    vector weights are per-coordinate block-diagonal so a single matmul
    handles all three coordinates with no in-kernel concatenates."""
    it = iter(refs)
    s_ref = next(it)                  # scalar features (or raw distances if has_rbf)
    v_ref = next(it)                  # (tn, 3*vi0), packed
    if has_rbf:
        mu_ref = next(it)
        gam_ref = next(it)
    if pre_add_ln:
        ds_ref = next(it)
        dv_ref = next(it)
        g0_ref = next(it)
        b0_ref = next(it)
    layer_refs = []
    for cfg in cfgs:
        lr = {"wh": next(it), "ws_s": next(it), "ws_n": next(it), "bs": next(it)}
        if cfg["vo"] > 0:
            lr["wv"] = next(it)
            if cfg["vector_gate"] and not cfg["fold_gate"]:
                lr["wsv"] = next(it)
                lr["bsv"] = next(it)
        layer_refs.append(lr)
    if has_ln:
        g_ref = next(it)
        b_ref = next(it)
    so_ref = next(it)
    vo_ref = next(it) if cfgs[-1]["vo"] > 0 else None

    f32, bf16 = jnp.float32, jnp.bfloat16

    if has_rbf:
        d = s_ref[...].astype(f32)                      # (tn, 1)
        diff = d - mu_ref[...]
        s = jnp.exp(-gam_ref[...] * diff * diff)        # Gaussian RBF expansion
    else:
        s = s_ref[...].astype(f32)
    v = v_ref[...].astype(f32)                          # (tn, 3*vi0)

    if pre_add_ln:                                      # residual add + LayerNorm0 prologue
        s = _ln_scalar(s + ds_ref[...].astype(f32), g0_ref[...], b0_ref[...])
        v = _ln_vector(v + dv_ref[...].astype(f32), v.shape[-1] // 3)
    if residual:
        s_res, v_res = s, v

    for cfg, lr in zip(cfgs, layer_refs):
        h, so, vo = cfg["h"], cfg["so"], cfg["vo"]

        # vector hidden: one block-diag matmul for all 3 coordinates
        vh = jnp.dot(v.astype(bf16), lr["wh"][...], preferred_element_type=f32)   # (tn, 3h)
        vn = jnp.sqrt(jnp.maximum(_coord_sumsq(vh, h), 1e-8))                      # (tn, h)

        # scalar path: two dots, no lane concat
        out = (jnp.dot(s.astype(bf16), lr["ws_s"][...], preferred_element_type=f32)
               + jnp.dot(vn.astype(bf16), lr["ws_n"][...], preferred_element_type=f32)
               + lr["bs"][...])
        if cfg["fold_gate"]:
            s_new = out[:, :so]
            gate = jax.nn.sigmoid(out[:, so:])          # gate folded into the main matmul
        else:
            s_new = out
            gate = None

        # vector output + gating
        if vo > 0:
            vout = jnp.dot(vh.astype(bf16), lr["wv"][...], preferred_element_type=f32)  # (tn, 3vo)
            if cfg["vector_gate"]:
                if gate is None:
                    gi = jax.nn.sigmoid(s_new) if cfg["vector_act"] == "sigmoid" else s_new
                    gate = jax.nn.sigmoid(
                        jnp.dot(gi.astype(bf16), lr["wsv"][...], preferred_element_type=f32)
                        + lr["bsv"][...])
                vout = vout * _rep3(gate, vo)
            elif cfg["vector_act"] == "sigmoid":
                vnorm = jnp.sqrt(jnp.maximum(_coord_sumsq(vout, vo), 1e-8))
                vout = vout * _rep3(jax.nn.sigmoid(vnorm), vo)
            v = vout
        else:
            v = None

        if cfg["scalar_act"] == "relu":
            s_new = jnp.maximum(s_new, 0.0)
        s = s_new

    if residual:
        s = s + s_res
        v = v + v_res

    if has_ln:
        s = _ln_scalar(s, g_ref[...], b_ref[...])
        if v is not None:
            v = _ln_vector(v, v.shape[-1] // 3)

    so_ref[...] = s.astype(so_ref.dtype)
    if vo_ref is not None:
        vo_ref[...] = v.astype(vo_ref.dtype)


# ----------------------------- kernel wrapper --------------------------------
def chain_apply(chain, s_in, v_in, tn, ds=None, dv=None,
                s_out_dtype=jnp.bfloat16, v_out_dtype=jnp.bfloat16):
    """Run a fused GVP chain.  s_in: (n_pad, si0); v_in: (n_pad, 3*vi0) packed."""
    layers = chain["layers"]
    cfgs = tuple(lc for _, lc in layers)
    n_pad, si0 = s_in.shape
    vw0 = v_in.shape[1]

    inputs = [s_in, v_in]
    in_specs = [pl.BlockSpec((tn, si0), lambda i: (i, 0)),
                pl.BlockSpec((tn, vw0), lambda i: (i, 0))]

    has_rbf = chain.get("rbf") is not None
    if has_rbf:
        rbf = chain["rbf"]
        inputs += [rbf["mu"], rbf["gamma"]]
        in_specs += [_full_spec(rbf["mu"]), _full_spec(rbf["gamma"])]

    pre_add_ln = ds is not None
    if pre_add_ln:
        ln0 = chain["ln0"]
        inputs += [ds, dv, ln0["gamma"], ln0["beta"]]
        in_specs += [pl.BlockSpec((tn, si0), lambda i: (i, 0)),
                     pl.BlockSpec((tn, vw0), lambda i: (i, 0)),
                     _full_spec(ln0["gamma"]), _full_spec(ln0["beta"])]

    for lp, lc in layers:
        w_list = [lp["wh"], lp["ws_s"], lp["ws_n"], lp["bs"]]
        if lc["vo"] > 0:
            w_list.append(lp["wv"])
            if lc["vector_gate"] and not lc["fold_gate"]:
                w_list += [lp["wsv"], lp["bsv"]]
        inputs += w_list
        in_specs += [_full_spec(w) for w in w_list]

    ln = chain.get("ln")
    if ln is not None:
        inputs += [ln["gamma"], ln["beta"]]
        in_specs += [_full_spec(ln["gamma"]), _full_spec(ln["beta"])]

    so = cfgs[-1]["so"]
    vo = cfgs[-1]["vo"]
    if vo > 0:
        out_shape = (jax.ShapeDtypeStruct((n_pad, so), s_out_dtype),
                     jax.ShapeDtypeStruct((n_pad, 3 * vo), v_out_dtype))
        out_specs = (pl.BlockSpec((tn, so), lambda i: (i, 0)),
                     pl.BlockSpec((tn, 3 * vo), lambda i: (i, 0)))
    else:
        out_shape = jax.ShapeDtypeStruct((n_pad, so), s_out_dtype)
        out_specs = pl.BlockSpec((tn, so), lambda i: (i, 0))

    kernel = functools.partial(_chain_kernel, cfgs=cfgs, has_rbf=has_rbf,
                               pre_add_ln=pre_add_ln,
                               residual=bool(chain.get("residual", False)),
                               has_ln=ln is not None)
    out = pl.pallas_call(
        kernel,
        grid=(n_pad // tn,),
        in_specs=in_specs,
        out_specs=out_specs,
        out_shape=out_shape,
        compiler_params=_compiler_params(),
    )(*inputs)

    if vo > 0:
        return out[0], out[1]
    return out, None


# ----------------------------- graph glue (plain JAX) -----------------------
def _masked_segment_mean(x, idx, num_segments, mask):
    x = x.astype(jnp.float32) * mask[:, None]
    summed = jax.ops.segment_sum(x, idx, num_segments=num_segments)
    cnt = jax.ops.segment_sum(mask, idx, num_segments=num_segments)
    return summed / jnp.maximum(cnt, 1.0)[:, None]


def conv_layer_apply(p, s, v, es, ev, src, dst, edge_valid, n_rows, tn_nodes, tn_edges):
    """GVPConvLayer: fused message GVP stack -> mean agg -> fused (add+LN0+FF+add+LN1)."""
    bf16 = jnp.bfloat16
    # TODO(synk): neighbor gather + scatter-mean stay in XLA; an in-kernel gather via
    # PrefetchScalarGridSpec only pays off at large edge counts.
    ms = jnp.concatenate([s[src], es, s[dst]], axis=-1)        # [s_j, edge_s, s_i]
    mv = jnp.concatenate([v[src], ev, v[dst]], axis=-1)        # packed [v_j, edge_v, v_i]
    ms, mv = chain_apply(p["msg"], ms, mv, tn_edges)

    dh_s = _masked_segment_mean(ms, dst, n_rows, edge_valid).astype(bf16)
    dh_v = _masked_segment_mean(mv, dst, n_rows, edge_valid).astype(bf16)

    # residual + LN0 fused as prologue of the FF chain; FF residual + LN1 fused too
    s, v = chain_apply(p["ff"], s, v, tn_nodes, ds=dh_s, dv=dh_v)
    return s, v


# ----------------------------- parameters -----------------------------------
class _Rng:
    def __init__(self, seed):
        self.key = jax.random.PRNGKey(seed)

    def next(self):
        self.key, k = jax.random.split(self.key)
        return k


def _linear(rng, din, dout, bias=True):
    w = jax.random.normal(rng.next(), (din, dout), jnp.float32) / jnp.sqrt(float(din))
    b = 0.01 * jax.random.normal(rng.next(), (1, dout), jnp.float32) if bias else None
    return w, b


def _pack_vec_weight(w, seg_sizes):
    """(sum(segs), h) -> (3*sum(segs), 3*h) per-coordinate block weight for packed layout."""
    w = np.asarray(w, np.float32)
    vi, h = w.shape
    assert sum(seg_sizes) == vi
    out = np.zeros((3 * vi, 3 * h), np.float32)
    in_off = row = 0
    for sz in seg_sizes:
        for c in range(3):
            out[in_off + c * sz:in_off + (c + 1) * sz, c * h:(c + 1) * h] = w[row:row + sz]
        in_off += 3 * sz
        row += sz
    return jnp.asarray(out)


def _gvp_layer(rng, si, vi, so, vo, vector_gate, scalar_act, vector_act, vec_segs=None):
    h = max(vi, vo) if vo > 0 else vi
    vec_segs = (vi,) if vec_segs is None else tuple(vec_segs)
    fold_gate = bool(vo > 0 and vector_gate and vector_act is None)

    wh, _ = _linear(rng, vi, h, bias=False)
    ws, bs = _linear(rng, si + h, so)
    ws_s, ws_n = ws[:si], ws[si:]

    p = {"wh": _pack_vec_weight(wh, vec_segs).astype(jnp.bfloat16)}
    if vo > 0:
        wv, _ = _linear(rng, h, vo, bias=False)
        p["wv"] = _pack_vec_weight(wv, (h,)).astype(jnp.bfloat16)
        if vector_gate:
            wsv, bsv = _linear(rng, so, vo)
            if fold_gate:
                # gate is linear in the pre-activation scalar output -> fold wsv into ws/bs
                ws_s = jnp.concatenate([ws_s, ws_s @ wsv], axis=1)
                ws_n = jnp.concatenate([ws_n, ws_n @ wsv], axis=1)
                bs = jnp.concatenate([bs, bs @ wsv + bsv], axis=1)
            else:
                p["wsv"] = wsv.astype(jnp.bfloat16)
                p["bsv"] = bsv
    p["ws_s"] = ws_s.astype(jnp.bfloat16)
    p["ws_n"] = ws_n.astype(jnp.bfloat16)
    p["bs"] = bs                                             # f32 bias
    cfg = dict(si=si, vi=vi, h=h, so=so, vo=vo, vector_gate=vector_gate,
               scalar_act=scalar_act, vector_act=vector_act, fold_gate=fold_gate)
    return p, cfg


def _ln_params(ns):
    return dict(gamma=jnp.ones((1, ns), jnp.float32),
                beta=jnp.zeros((1, ns), jnp.float32))


def _conv_layer_params(rng, node_dims, edge_dims, n_message, n_feedforward):
    ns, nv = node_dims
    se, ve = edge_dims
    act = dict(vector_gate=True, scalar_act="relu", vector_act="sigmoid")
    noact = dict(vector_gate=True, scalar_act=None, vector_act=None)

    msg = [_gvp_layer(rng, 2 * ns + se, 2 * nv + ve, ns, nv,
                      vec_segs=(nv, ve, nv), **act)]
    for _ in range(n_message - 2):
        msg.append(_gvp_layer(rng, ns, nv, ns, nv, **act))
    msg.append(_gvp_layer(rng, ns, nv, ns, nv, **noact))
    msg_chain = dict(layers=msg, rbf=None, residual=False, ln=None)

    ff = []
    if n_feedforward == 1:
        ff.append(_gvp_layer(rng, ns, nv, ns, nv, **noact))
    else:
        hs, hv = 4 * ns, 2 * nv
        ff.append(_gvp_layer(rng, ns, nv, hs, hv, **act))
        for _ in range(n_feedforward - 2):
            ff.append(_gvp_layer(rng, hs, hv, hs, hv, **act))
        ff.append(_gvp_layer(rng, hs, hv, ns, nv, **noact))
    # ln0 = post-aggregation residual LayerNorm (fused as FF-chain prologue); ln = LN1
    ff_chain = dict(layers=ff, rbf=None, residual=True,
                    ln=_ln_params(ns), ln0=_ln_params(ns))
    return dict(msg=msg_chain, ff=ff_chain)


def make_params(seed=0):
    rng = _Rng(seed)
    ns, nv = NODE_DIMS
    se, ve = EDGE_DIMS

    atom_emb = 0.1 * jax.random.normal(rng.next(), (ATOM_VOCAB, ns), jnp.float32)
    atom_emb = atom_emb.at[0].set(0.0)                    # padding_idx = 0
    res_emb = 0.1 * jax.random.normal(rng.next(), (RES_VOCAB, ns), jnp.float32)
    res_emb = res_emb.at[0].set(0.0)

    # TODO(synk): exact torch_gvp RBF parameterization unknown; trainable Gaussian
    # basis exp(-((d-mu)/sigma)^2) with mu = linspace(0, init_max_distance, D).
    sigma = INIT_MAX_DIST / se
    rbf = dict(mu=jnp.linspace(0.0, INIT_MAX_DIST, se).reshape(1, se).astype(jnp.float32),
               gamma=jnp.full((1, se), 1.0 / (sigma * sigma), jnp.float32))

    nogate = dict(vector_gate=False, scalar_act=None, vector_act=None)
    first_node = dict(layers=[_gvp_layer(rng, ns, 2, ns, nv, **nogate)],
                      rbf=None, residual=False, ln=_ln_params(ns))
    first_edge = dict(layers=[_gvp_layer(rng, se, 1, se, ve, **nogate)],
                      rbf=rbf, residual=False, ln=_ln_params(se))
    conv_layers = [_conv_layer_params(rng, NODE_DIMS, EDGE_DIMS,
                                      CONV_N_MESSAGE, CONV_N_FEEDFORWARD)
                   for _ in range(N_ATOM_CONV + N_RES_CONV)]
    head = dict(layers=[_gvp_layer(rng, ns, nv, SEQ_CLASSES, 0, **nogate)],
                rbf=None, residual=False, ln=None)

    return dict(atom_emb=atom_emb, res_emb=res_emb,
                first_node=first_node, first_edge=first_edge,
                conv_layers=conv_layers, head=head)


# ----------------------------- forward pass ---------------------------------
def _pack_vectors(v):
    """(N, c, 3) -> (N, 3*c) lane-packed [x-block | y-block | z-block]."""
    n, c, _ = v.shape
    return jnp.transpose(v, (0, 2, 1)).reshape(n, 3 * c)


def residue_gvp_forward(params, atom_type, residue_type, node_v, edge_s, edge_v,
                        edge_index, residue_index, num_residues):
    n_atoms = atom_type.shape[0]
    n_edges = edge_s.shape[0]
    tn_a, a_pad = _row_tiling(n_atoms)
    tn_e, e_pad = _row_tiling(n_edges)
    tn_r, r_pad = _row_tiling(num_residues)
    bf16 = jnp.bfloat16

    # embeddings (gather, glue) + one-time row padding / lane-packed vector layout
    node_s = params["atom_emb"][atom_type] + params["res_emb"][residue_type]
    node_s = jnp.pad(node_s, ((0, a_pad - n_atoms), (0, 0))).astype(bf16)
    node_v = jnp.pad(_pack_vectors(node_v), ((0, a_pad - n_atoms), (0, 0))).astype(bf16)
    edge_d = jnp.pad(edge_s.reshape(-1, 1).astype(jnp.float32),
                     ((0, e_pad - n_edges), (0, 0)))
    edge_v = jnp.pad(_pack_vectors(edge_v), ((0, e_pad - n_edges), (0, 0))).astype(bf16)

    src = jnp.pad(edge_index[0], (0, e_pad - n_edges))
    dst = jnp.pad(edge_index[1], (0, e_pad - n_edges))
    res_idx = jnp.pad(residue_index, (0, a_pad - n_atoms))
    edge_valid = (jnp.arange(e_pad) < n_edges).astype(jnp.float32)
    atom_valid = (jnp.arange(a_pad) < n_atoms).astype(jnp.float32)

    # first node layer: GVP + LayerNorm fused; first edge layer: RBF + GVP + LN fused
    node_s, node_v = chain_apply(params["first_node"], node_s, node_v, tn_a)
    edge_sf, edge_vf = chain_apply(params["first_edge"], edge_d, edge_v, tn_e)

    for i in range(N_ATOM_CONV):
        node_s, node_v = conv_layer_apply(params["conv_layers"][i], node_s, node_v,
                                          edge_sf, edge_vf, src, dst, edge_valid,
                                          a_pad, tn_a, tn_e)

    # residue pooling: mean of atom features per residue (vectors already 2-D packed)
    node_s = _masked_segment_mean(node_s, res_idx, r_pad, atom_valid).astype(bf16)
    node_v = _masked_segment_mean(node_v, res_idx, r_pad, atom_valid).astype(bf16)
    # TODO(synk): residue-level multi-edges are kept with remapped indices (not coalesced
    # as torch_gvp's vector_mean_pool may do), so duplicate edges weight the mean differently.
    src = res_idx[src]
    dst = res_idx[dst]

    for i in range(N_RES_CONV):
        node_s, node_v = conv_layer_apply(params["conv_layers"][N_ATOM_CONV + i],
                                          node_s, node_v, edge_sf, edge_vf,
                                          src, dst, edge_valid, r_pad, tn_r, tn_e)

    out, _ = chain_apply(params["head"], node_s, node_v, tn_r,
                         s_out_dtype=jnp.float32)
    return out[:num_residues]                               # (num_residues, 21)


# ----------------------------- main ------------------------------------------
if __name__ == "__main__":
    params = make_params(seed=0)

    key = jax.random.PRNGKey(0)
    ks = jax.random.split(key, 8)
    N_ATOMS, N_RESIDUES, N_EDGES = 24, 8, 48

    atom_type = jax.random.randint(ks[0], (N_ATOMS,), 1, ATOM_VOCAB)
    residue_type = jax.random.randint(ks[1], (N_ATOMS,), 1, RES_VOCAB)
    node_v = jax.random.normal(ks[2], (N_ATOMS, 2, 3), jnp.float32)
    edge_s = jax.random.uniform(ks[3], (N_EDGES,), jnp.float32, 0.5, INIT_MAX_DIST)
    edge_v = jax.random.normal(ks[4], (N_EDGES, 1, 3), jnp.float32)
    edge_index = jax.random.randint(ks[5], (2, N_EDGES), 0, N_ATOMS)
    residue_index = jnp.repeat(jnp.arange(N_RESIDUES, dtype=jnp.int32),
                               N_ATOMS // N_RESIDUES)

    out = residue_gvp_forward(params, atom_type, residue_type, node_v, edge_s, edge_v,
                              edge_index, residue_index, N_RESIDUES)
    out = jax.block_until_ready(out)

    assert out.shape == (N_RESIDUES, SEQ_CLASSES), out.shape
    assert bool(jnp.all(jnp.isfinite(out)))
    print("KERNEL_OK")
</pallas_src>

<mosaic_0001>
module attributes {stable_mosaic.version = 11 : i64} {
  func.func @_chain_kernel(%arg0: i32, %arg1: memref<24x128xbf16, #tpu.memory_space<vmem>>, %arg2: memref<24x6xbf16, #tpu.memory_space<vmem>>, %arg3: memref<6x48xbf16, #tpu.memory_space<vmem>>, %arg4: memref<128x128xbf16, #tpu.memory_space<vmem>>, %arg5: memref<16x128xbf16, #tpu.memory_space<vmem>>, %arg6: memref<1x128xf32, #tpu.memory_space<vmem>>, %arg7: memref<48x48xbf16, #tpu.memory_space<vmem>>, %arg8: memref<1x128xf32, #tpu.memory_space<vmem>>, %arg9: memref<1x128xf32, #tpu.memory_space<vmem>>, %arg10: memref<24x128xbf16, #tpu.memory_space<vmem>>, %arg11: memref<24x48xbf16, #tpu.memory_space<vmem>>) attributes {dimension_semantics = [#tpu.dimension_semantics<parallel>], iteration_bounds = array<i64: 1>, scalar_prefetch = 0 : i64, scratch_operands = 0 : i64, tpu.core_type = #tpu.core_type<tc>, window_params = [{transform_indices = @transform_0, window_bounds = array<i64: 24, 128>}, {transform_indices = @transform_1, window_bounds = array<i64: 24, 6>}, {pipeline_mode = #tpu.pipeline_mode<synchronous>, transform_indices = @transform_2, window_bounds = array<i64: 6, 48>}, {pipeline_mode = #tpu.pipeline_mode<synchronous>, transform_indices = @transform_3, window_bounds = array<i64: 128, 128>}, {pipeline_mode = #tpu.pipeline_mode<synchronous>, transform_indices = @transform_4, window_bounds = array<i64: 16, 128>}, {pipeline_mode = #tpu.pipeline_mode<synchronous>, transform_indices = @transform_5, window_bounds = array<i64: 1, 128>}, {pipeline_mode = #tpu.pipeline_mode<synchronous>, transform_indices = @transform_6, window_bounds = array<i64: 48, 48>}, {pipeline_mode = #tpu.pipeline_mode<synchronous>, transform_indices = @transform_7, window_bounds = array<i64: 1, 128>}, {pipeline_mode = #tpu.pipeline_mode<synchronous>, transform_indices = @transform_8, window_bounds = array<i64: 1, 128>}, {transform_indices = @transform_9, window_bounds = array<i64: 24, 128>}, {transform_indices = @transform_10, window_bounds = array<i64: 24, 48>}]} {
    %c0 = arith.constant 0 : index
    %c0_0 = arith.constant 0 : index
    %0 = vector.load %arg1[%c0, %c0_0] : memref<24x128xbf16, #tpu.memory_space<vmem>>, vector<24x128xbf16>
    %1 = arith.extf %0 : vector<24x128xbf16> to vector<24x128xf32>
    %c0_1 = arith.constant 0 : index
    %c0_2 = arith.constant 0 : index
    %2 = vector.load %arg2[%c0_1, %c0_2] : memref<24x6xbf16, #tpu.memory_space<vmem>>, vector<24x6xbf16>
    %3 = arith.extf %2 : vector<24x6xbf16> to vector<24x6xf32>
    %4 = arith.truncf %3 : vector<24x6xf32> to vector<24x6xbf16>
    %c0_3 = arith.constant 0 : index
    %c0_4 = arith.constant 0 : index
    %5 = vector.load %arg3[%c0_3, %c0_4] : memref<6x48xbf16, #tpu.memory_space<vmem>>, vector<6x48xbf16>
    %cst = arith.constant dense<0.000000e+00> : vector<24x48xf32>
    %6 = tpu.matmul %4, %5, %cst {dimension_numbers = #tpu.dot_dimension_numbers<[1], [0], [0], [1], [0, 0, 1, 1], [], []>} : vector<24x6xbf16>, vector<6x48xbf16>, vector<24x48xf32> -> vector<24x48xf32>
    %7 = arith.mulf %6, %6 : vector<24x48xf32>
    %8 = tpu.iota {dimensions = array<i32: 0>} : vector<48x16xi32>
    %c16_i32 = arith.constant 16 : i32
    %c0_i32 = arith.constant 0 : i32
    %9 = arith.cmpi eq, %c16_i32, %c0_i32 : i32
    %c1_i32 = arith.constant 1 : i32
    %10 = arith.select %9, %c1_i32, %c16_i32 : i32
    %11 = vector.broadcast %10 : i32 to vector<48x16xi32>
    %12 = arith.remsi %8, %11 : vector<48x16xi32>
    %c0_i32_5 = arith.constant 0 : i32
    %13 = vector.broadcast %c0_i32_5 : i32 to vector<48x16xi32>
    %14 = arith.cmpi ne, %12, %13 : vector<48x16xi32>
    %c0_i32_6 = arith.constant 0 : i32
    %15 = vector.broadcast %c0_i32_6 : i32 to vector<48x16xi32>
    %16 = arith.cmpi slt, %12, %15 : vector<48x16xi32>
    %c0_i32_7 = arith.constant 0 : i32
    %17 = arith.cmpi slt, %10, %c0_i32_7 : i32
    %18 = vector.broadcast %17 : i1 to vector<48x16xi1>
    %19 = vector.broadcast %18 : vector<48x16xi1> to vector<48x16xi1>
    %20 = arith.xori %16, %19 : vector<48x16xi1>
    %21 = arith.andi %20, %14 : vector<48x16xi1>
    %22 = vector.broadcast %10 : i32 to vector<48x16xi32>
    %23 = arith.addi %12, %22 : vector<48x16xi32>
    %24 = arith.select %21, %23, %12 : vector<48x16xi1>, vector<48x16xi32>
    %25 = tpu.iota {dimensions = array<i32: 1>} : vector<48x16xi32>
    %26 = arith.cmpi eq, %24, %25 : vector<48x16xi32>
    %27 = arith.extui %26 : vector<48x16xi1> to vector<48x16xi32>
    %28 = arith.sitofp %27 : vector<48x16xi32> to vector<48x16xf32>
    %cst_8 = arith.constant dense<0.000000e+00> : vector<24x16xf32>
    %29 = tpu.matmul %7, %28, %cst_8 {dimension_numbers = #tpu.dot_dimension_numbers<[1], [0], [0], [1], [0, 0, 1, 1], [], []>} : vector<24x48xf32>, vector<48x16xf32>, vector<24x16xf32> -> vector<24x16xf32>
    %cst_9 = arith.constant 9.99999993E-9 : f32
    %30 = vector.broadcast %cst_9 : f32 to vector<24x16xf32>
    %31 = arith.maximumf %29, %30 : vector<24x16xf32>
    %32 = math.sqrt %31 : vector<24x16xf32>
    %33 = arith.truncf %1 : vector<24x128xf32> to vector<24x128xbf16>
    %c0_10 = arith.constant 0 : index
    %c0_11 = arith.constant 0 : index
    %34 = vector.load %arg4[%c0_10, %c0_11] : memref<128x128xbf16, #tpu.memory_space<vmem>>, vector<128x128xbf16>
    %cst_12 = arith.constant dense<0.000000e+00> : vector<24x128xf32>
    %35 = tpu.matmul %33, %34, %cst_12 {dimension_numbers = #tpu.dot_dimension_numbers<[1], [0], [0], [1], [0, 0, 1, 1], [], []>} : vector<24x128xbf16>, vector<128x128xbf16>, vector<24x128xf32> -> vector<24x128xf32>
    %36 = arith.truncf %32 : vector<24x16xf32> to vector<24x16xbf16>
    %c0_13 = arith.constant 0 : index
    %c0_14 = arith.constant 0 : index
    %37 = vector.load %arg5[%c0_13, %c0_14] : memref<16x128xbf16, #tpu.memory_space<vmem>>, vector<16x128xbf16>
    %cst_15 = arith.constant dense<0.000000e+00> : vector<24x128xf32>
    %38 = tpu.matmul %36, %37, %cst_15 {dimension_numbers = #tpu.dot_dimension_numbers<[1], [0], [0], [1], [0, 0, 1, 1], [], []>} : vector<24x16xbf16>, vector<16x128xbf16>, vector<24x128xf32> -> vector<24x128xf32>
    %39 = arith.addf %35, %38 : vector<24x128xf32>
    %c0_16 = arith.constant 0 : index
    %c0_17 = arith.constant 0 : index
    %40 = vector.load %arg6[%c0_16, %c0_17] : memref<1x128xf32, #tpu.memory_space<vmem>>, vector<1x128xf32>
    %41 = vector.broadcast %40 : vector<1x128xf32> to vector<24x128xf32>
    %42 = arith.addf %39, %41 : vector<24x128xf32>
    %43 = arith.truncf %6 : vector<24x48xf32> to vector<24x48xbf16>
    %c0_18 = arith.constant 0 : index
    %c0_19 = arith.constant 0 : index
    %44 = vector.load %arg7[%c0_18, %c0_19] : memref<48x48xbf16, #tpu.memory_space<vmem>>, vector<48x48xbf16>
    %cst_20 = arith.constant dense<0.000000e+00> : vector<24x48xf32>
    %45 = tpu.matmul %43, %44, %cst_20 {dimension_numbers = #tpu.dot_dimension_numbers<[1], [0], [0], [1], [0, 0, 1, 1], [], []>} : vector<24x48xbf16>, vector<48x48xbf16>, vector<24x48xf32> -> vector<24x48xf32>
    %c0_21 = arith.constant 0 : index
    %c0_22 = arith.constant 0 : index
    %46 = vector.load %arg8[%c0_21, %c0_22] : memref<1x128xf32, #tpu.memory_space<vmem>>, vector<1x128xf32>
    %c0_23 = arith.constant 0 : index
    %c0_24 = arith.constant 0 : index
    %47 = vector.load %arg9[%c0_23, %c0_24] : memref<1x128xf32, #tpu.memory_space<vmem>>, vector<1x128xf32>
    %cst_25 = arith.constant dense<0.000000e+00> : vector<24xf32>
    %48 = vector.multi_reduction <add>, %42, %cst_25 [1] : vector<24x128xf32> to vector<24xf32>
    %49 = vector.shape_cast %48 : vector<24xf32> to vector<24x1xf32>
    %cst_26 = arith.constant 1.280000e+02 : f32
    %50 = vector.broadcast %cst_26 : f32 to vector<24x1xf32>
    %51 = arith.divf %49, %50 : vector<24x1xf32>
    %52 = vector.broadcast %51 : vector<24x1xf32> to vector<24x128xf32>
    %53 = arith.subf %42, %52 : vector<24x128xf32>
    %54 = arith.mulf %53, %53 : vector<24x128xf32>
    %cst_27 = arith.constant dense<0.000000e+00> : vector<24xf32>
    %55 = vector.multi_reduction <add>, %54, %cst_27 [1] : vector<24x128xf32> to vector<24xf32>
    %56 = vector.shape_cast %55 : vector<24xf32> to vector<24x1xf32>
    %cst_28 = arith.constant 1.280000e+02 : f32
    %57 = vector.broadcast %cst_28 : f32 to vector<24x1xf32>
    %58 = arith.divf %56, %57 : vector<24x1xf32>
    %59 = vector.broadcast %51 : vector<24x1xf32> to vector<24x128xf32>
    %60 = arith.subf %42, %59 : vector<24x128xf32>
    %cst_29 = arith.constant 9.99999974E-6 : f32
    %61 = vector.broadcast %cst_29 : f32 to vector<24x1xf32>
    %62 = arith.addf %58, %61 : vector<24x1xf32>
    %63 = math.rsqrt %62 : vector<24x1xf32>
    %64 = vector.broadcast %63 : vector<24x1xf32> to vector<24x128xf32>
    %65 = arith.mulf %60, %64 : vector<24x128xf32>
    %66 = vector.broadcast %46 : vector<1x128xf32> to vector<24x128xf32>
    %67 = arith.mulf %65, %66 : vector<24x128xf32>
    %68 = vector.broadcast %47 : vector<1x128xf32> to vector<24x128xf32>
    %69 = arith.addf %67, %68 : vector<24x128xf32>
    %70 = arith.mulf %45, %45 : vector<24x48xf32>
    %71 = tpu.iota {dimensions = array<i32: 0>} : vector<48x16xi32>
    %c16_i32_30 = arith.constant 16 : i32
    %c0_i32_31 = arith.constant 0 : i32
    %72 = arith.cmpi eq, %c16_i32_30, %c0_i32_31 : i32
    %c1_i32_32 = arith.constant 1 : i32
    %73 = arith.select %72, %c1_i32_32, %c16_i32_30 : i32
    %74 = vector.broadcast %73 : i32 to vector<48x16xi32>
    %75 = arith.remsi %71, %74 : vector<48x16xi32>
    %c0_i32_33 = arith.constant 0 : i32
    %76 = vector.broadcast %c0_i32_33 : i32 to vector<48x16xi32>
    %77 = arith.cmpi ne, %75, %76 : vector<48x16xi32>
    %c0_i32_34 = arith.constant 0 : i32
    %78 = vector.broadcast %c0_i32_34 : i32 to vector<48x16xi32>
    %79 = arith.cmpi slt, %75, %78 : vector<48x16xi32>
    %c0_i32_35 = arith.constant 0 : i32
    %80 = arith.cmpi slt, %73, %c0_i32_35 : i32
    %81 = vector.broadcast %80 : i1 to vector<48x16xi1>
    %82 = vector.broadcast %81 : vector<48x16xi1> to vector<48x16xi1>
    %83 = arith.xori %79, %82 : vector<48x16xi1>
    %84 = arith.andi %83, %77 : vector<48x16xi1>
    %85 = vector.broadcast %73 : i32 to vector<48x16xi32>
    %86 = arith.addi %75, %85 : vector<48x16xi32>
    %87 = arith.select %84, %86, %75 : vector<48x16xi1>, vector<48x16xi32>
    %88 = tpu.iota {dimensions = array<i32: 1>} : vector<48x16xi32>
    %89 = arith.cmpi eq, %87, %88 : vector<48x16xi32>
    %90 = arith.extui %89 : vector<48x16xi1> to vector<48x16xi32>
    %91 = arith.sitofp %90 : vector<48x16xi32> to vector<48x16xf32>
    %cst_36 = arith.constant dense<0.000000e+00> : vector<24x16xf32>
    %92 = tpu.matmul %70, %91, %cst_36 {dimension_numbers = #tpu.dot_dimension_numbers<[1], [0], [0], [1], [0, 0, 1, 1], [], []>} : vector<24x48xf32>, vector<48x16xf32>, vector<24x16xf32> -> vector<24x16xf32>
    %cst_37 = arith.constant 9.99999993E-9 : f32
    %93 = vector.broadcast %cst_37 : f32 to vector<24x16xf32>
    %94 = arith.maximumf %92, %93 : vector<24x16xf32>
    %cst_38 = arith.constant dense<0.000000e+00> : vector<24xf32>
    %95 = vector.multi_reduction <add>, %94, %cst_38 [1] : vector<24x16xf32> to vector<24xf32>
    %96 = vector.shape_cast %95 : vector<24xf32> to vector<24x1xf32>
    %cst_39 = arith.constant 1.600000e+01 : f32
    %97 = vector.broadcast %cst_39 : f32 to vector<24x1xf32>
    %98 = arith.divf %96, %97 : vector<24x1xf32>
    %99 = math.rsqrt %98 : vector<24x1xf32>
    %100 = vector.broadcast %99 : vector<24x1xf32> to vector<24x48xf32>
    %101 = arith.mulf %45, %100 : vector<24x48xf32>
    %102 = arith.truncf %69 : vector<24x128xf32> to vector<24x128xbf16>
    %c0_40 = arith.constant 0 : index
    %c0_41 = arith.constant 0 : index
    %103 = vector.load %arg10[%c0_40, %c0_41] : memref<24x128xbf16, #tpu.memory_space<vmem>>, vector<24x128xbf16>
    tpu.vector_store %arg10[%c0_40, %c0_41], %102 {strides = array<i32>} : memref<24x128xbf16, #tpu.memory_space<vmem>>, vector<24x128xbf16>,
    %104 = arith.truncf %101 : vector<24x48xf32> to vector<24x48xbf16>
    %c0_42 = arith.constant 0 : index
    %c0_43 = arith.constant 0 : index
    %105 = vector.load %arg11[%c0_42, %c0_43] : memref<24x48xbf16, #tpu.memory_space<vmem>>, vector<24x48xbf16>
    tpu.vector_store %arg11[%c0_42, %c0_43], %104 {strides = array<i32>} : memref<24x48xbf16, #tpu.memory_space<vmem>>, vector<24x48xbf16>,
    return
  }
  func.func @transform_0(%arg0: i32) -> (i32, i32) {
    %c0_i32 = arith.constant 0 : i32
    %c0_i32_0 = arith.constant 0 : i32
    return %arg0, %c0_i32 : i32, i32
  }
  func.func @transform_1(%arg0: i32) -> (i32, i32) {
    %c0_i32 = arith.constant 0 : i32
    %c0_i32_0 = arith.constant 0 : i32
    return %arg0, %c0_i32 : i32, i32
  }
  func.func @transform_2(%arg0: i32) -> (i32, i32) {
    %c0_i32 = arith.constant 0 : i32
    %c0_i32_0 = arith.constant 0 : i32
    %c0_i32_1 = arith.constant 0 : i32
    return %c0_i32, %c0_i32_0 : i32, i32
  }
  func.func @transform_3(%arg0: i32) -> (i32, i32) {
    %c0_i32 = arith.constant 0 : i32
    %c0_i32_0 = arith.constant 0 : i32
    %c0_i32_1 = arith.constant 0 : i32
    return %c0_i32, %c0_i32_0 : i32, i32
  }
  func.func @transform_4(%arg0: i32) -> (i32, i32) {
    %c0_i32 = arith.constant 0 : i32
    %c0_i32_0 = arith.constant 0 : i32
    %c0_i32_1 = arith.constant 0 : i32
    return %c0_i32, %c0_i32_0 : i32, i32
  }
  func.func @transform_5(%arg0: i32) -> (i32, i32) {
    %c0_i32 = arith.constant 0 : i32
    %c0_i32_0 = arith.constant 0 : i32
    %c0_i32_1 = arith.constant 0 : i32
    return %c0_i32, %c0_i32_0 : i32, i32
  }
  func.func @transform_6(%arg0: i32) -> (i32, i32) {
    %c0_i32 = arith.constant 0 : i32
    %c0_i32_0 = arith.constant 0 : i32
    %c0_i32_1 = arith.constant 0 : i32
    return %c0_i32, %c0_i32_0 : i32, i32
  }
  func.func @transform_7(%arg0: i32) -> (i32, i32) {
    %c0_i32 = arith.constant 0 : i32
    %c0_i32_0 = arith.constant 0 : i32
    %c0_i32_1 = arith.constant 0 : i32
    return %c0_i32, %c0_i32_0 : i32, i32
  }
  func.func @transform_8(%arg0: i32) -> (i32, i32) {
    %c0_i32 = arith.constant 0 : i32
    %c0_i32_0 = arith.constant 0 : i32
    %c0_i32_1 = arith.constant 0 : i32
    return %c0_i32, %c0_i32_0 : i32, i32
  }
  func.func @transform_9(%arg0: i32) -> (i32, i32) {
    %c0_i32 = arith.constant 0 : i32
    %c0_i32_0 = arith.constant 0 : i32
    return %arg0, %c0_i32 : i32, i32
  }
  func.func @transform_10(%arg0: i32) -> (i32, i32) {
    %c0_i32 = arith.constant 0 : i32
    %c0_i32_0 = arith.constant 0 : i32
    return %arg0, %c0_i32 : i32, i32
  }
}

</mosaic_0001>

<llo_original>
// kernel: tpu_custom_call.1
$region0: #{tpu_custom_call.1}
  #allocation0 [shape = 'u32[]', space=smem, size = 0x4, offset = 0x4, fixed_abs, tag = 'smem constant byte address 0x4 - core index']
  #allocation1 [shape = 'u32[144,128]{1,0:T(1,128)}', space=vmem, size = 0x12000, scoped, tag = 'internal scratch']
  %s0 = inlined_call_operand.vmem [shape: bf16[24,128], index: 0, kind: input, shape index: {}]
  %s1 = inlined_call_operand.vmem [shape: bf16[24,6], index: 1, kind: input, shape index: {}]
  %s2 = inlined_call_operand.hbm [shape: bf16[6,48], index: 2, kind: input, shape index: {}]
  %s3 = inlined_call_operand.hbm [shape: bf16[128,128], index: 3, kind: input, shape index: {}]
  %s4 = inlined_call_operand.hbm [shape: bf16[16,128], index: 4, kind: input, shape index: {}]
  %s5 = inlined_call_operand.vmem [shape: f32[1,128], index: 5, kind: input, shape index: {}]
  %s6 = inlined_call_operand.vmem [shape: bf16[48,48], index: 6, kind: input, shape index: {}]
  %s7 = inlined_call_operand.vmem [shape: f32[1,128], index: 7, kind: input, shape index: {}]
  %s8 = inlined_call_operand.vmem [shape: f32[1,128], index: 8, kind: input, shape index: {}]
  %s9 = inlined_call_operand.hbm [shape: bf16[24,128], index: 9, kind: output, shape index: {0}]
  %s10 = inlined_call_operand.hbm [shape: bf16[24,48], index: 10, kind: output, shape index: {1}]
  %11 = xla_tuple %s9, %s10
  %s12 = sld [smem:[#allocation0]]
  $region66: #{tpu_custom_call.1} parent=0
    _
  %s14 = ssub.s32 1, %s12
  %s15 = scalar_select 0, %s14, %s12
  $region1: #{tpu_custom_call.1} parent=0
    #allocation2 [shape = 'u8[2048]{0}', space=vmem, size = 0x800, scoped, tag = 'input window, operand 2, single buffered']
    #allocation3 [shape = 's32[1]{0}', space=sflag, size = 0x4, scoped, tag = 'scoped memory for tpu_custom_call.1']
    #allocation4 [shape = 's32[1]{0}', space=sflag, size = 0x4, scoped, tag = 'scoped memory for tpu_custom_call.1']
    #allocation5 [shape = 'u8[32768]{0}', space=vmem, size = 0x8000, scoped, tag = 'input window, operand 3, single buffered']
    #allocation6 [shape = 's32[1]{0}', space=sflag, size = 0x4, scoped, tag = 'scoped memory for tpu_custom_call.1']
    #allocation7 [shape = 'u8[4096]{0}', space=vmem, size = 0x1000, scoped, tag = 'input window, operand 4, single buffered']
    #allocation8 [shape = 'u8[6144]{0}', space=vmem, size = 0x1800, scoped, tag = 'output window, operand 0, single buffered']
    #allocation9 [shape = 'u8[6144]{0}', space=vmem, size = 0x1800, scoped, tag = 'output window, operand 1, single buffered']
    #allocation10 [shape = 's32[1]{0}', space=sflag, size = 0x4, scoped, tag = 'scoped memory for tpu_custom_call.1']
    %16 = vsyncpa [#allocation3], 0
    %17 = vsyncpa [#allocation6], 0
    %18 = vsyncpa [#allocation4], 0
    %19 = vsyncpa [#allocation10], 0
    // Predicated region
    $region2: #{tpu_custom_call.1} parent=1 // pred_check
      _
    $region3: #{tpu_custom_call.1} parent=1 // pred_check_branch
      %21 = sbr.rel (0) target = $region5
    $region4: #{tpu_custom_call.1} parent=1 // pred_region
      _
    $region5: #{tpu_custom_call.1} parent=1 // pred_fallthru
      _
    // Predicated region
    $region6: #{tpu_custom_call.1} parent=1 // pred_check
      _
    $region7: #{tpu_custom_call.1} parent=1 // pred_check_branch
      %23 = sbr.rel (0) target = $region9
    $region8: #{tpu_custom_call.1} parent=1 // pred_region
      _
    $region9: #{tpu_custom_call.1} parent=1 // pred_fallthru
      _
    // Predicated region
    $region10: #{tpu_custom_call.1} parent=1 // pred_check
      _
    $region11: #{tpu_custom_call.1} parent=1 // pred_check_branch
      %25 = sbr.rel (0) target = $region13
    $region12: #{tpu_custom_call.1} parent=1 // pred_region
      %s27 = ssub.s32 64, 64
      %28 = vsyncadd [#allocation3], %s27
      %s30 = sshll.u32 [#allocation2], 4
      %s31 = int_to_ptr.vmem [resolvable:$true] %s30
      %33 = dma.hbm_to_vmem [thread:$0]  %s2, 64, %s31, [#allocation3]
    $region13: #{tpu_custom_call.1} parent=1 // pred_fallthru
      _
    // Predicated region
    $region14: #{tpu_custom_call.1} parent=1 // pred_check
      _
    $region15: #{tpu_custom_call.1} parent=1 // pred_check_branch
      %35 = sbr.rel (0) target = $region17
    $region16: #{tpu_custom_call.1} parent=1 // pred_region
      %s37 = ssub.s32 1024, 1024
      %38 = vsyncadd [#allocation6], %s37
      %s39 = sshll.u32 [#allocation5], 4
      %s40 = int_to_ptr.vmem [resolvable:$true] %s39
      %45 = dma.hbm_to_vmem [thread:$0]  %s3, 1024, %s40, [#allocation6], 64, 64, 4
    $region17: #{tpu_custom_call.1} parent=1 // pred_fallthru
      _
    // Predicated region
    $region18: #{tpu_custom_call.1} parent=1 // pred_check
      _
    $region19: #{tpu_custom_call.1} parent=1 // pred_check_branch
      %47 = sbr.rel (0) target = $region21
    $region20: #{tpu_custom_call.1} parent=1 // pred_region
      %s49 = ssub.s32 128, 128
      %50 = vsyncadd [#allocation6], %s49
      %s51 = sshll.u32 [#allocation7], 4
      %s52 = int_to_ptr.vmem [resolvable:$true] %s51
      %57 = dma.hbm_to_vmem [thread:$0]  %s4, 128, %s52, [#allocation6], 64, 64, 4
    $region21: #{tpu_custom_call.1} parent=1 // pred_fallthru
      _
    // Predicated region
    $region22: #{tpu_custom_call.1} parent=1 // pred_check
      _
    $region23: #{tpu_custom_call.1} parent=1 // pred_check_branch
      %59 = sbr.rel (0) target = $region25
    $region24: #{tpu_custom_call.1} parent=1 // pred_region
      _
    $region25: #{tpu_custom_call.1} parent=1 // pred_fallthru
      _
    // Predicated region
    $region26: #{tpu_custom_call.1} parent=1 // pred_check
      _
    $region27: #{tpu_custom_call.1} parent=1 // pred_check_branch
      %61 = sbr.rel (0) target = $region29
    $region28: #{tpu_custom_call.1} parent=1 // pred_region
      _
    $region29: #{tpu_custom_call.1} parent=1 // pred_fallthru
      _
    // Predicated region
    $region30: #{tpu_custom_call.1} parent=1 // pred_check
      _
    $region31: #{tpu_custom_call.1} parent=1 // pred_check_branch
      %63 = sbr.rel (0) target = $region33
    $region32: #{tpu_custom_call.1} parent=1 // pred_region
      _
    $region33: #{tpu_custom_call.1} parent=1 // pred_fallthru
      _
    // Predicated region
    $region34: #{tpu_custom_call.1} parent=1 // pred_check
      _
    $region35: #{tpu_custom_call.1} parent=1 // pred_check_branch
      %65 = sbr.rel (0) target = $region37
    $region36: #{tpu_custom_call.1} parent=1 // pred_region
      _
    $region37: #{tpu_custom_call.1} parent=1 // pred_fallthru
      _
    // Predicated region
    $region38: #{tpu_custom_call.1} parent=1 // pred_check
      _
    $region39: #{tpu_custom_call.1} parent=1 // pred_check_branch
      %67 = sbr.rel (0) target = $region41
    $region40: #{tpu_custom_call.1} parent=1 // pred_region
      %68 = dma.done [#allocation3], 64
    $region41: #{tpu_custom_call.1} parent=1 // pred_fallthru
      _
    // Predicated region
    $region42: #{tpu_custom_call.1} parent=1 // pred_check
      _
    $region43: #{tpu_custom_call.1} parent=1 // pred_check_branch
      %70 = sbr.rel (0) target = $region45
    $region44: #{tpu_custom_call.1} parent=1 // pred_region
      %71 = dma.done [#allocation6], 1024
    $region45: #{tpu_custom_call.1} parent=1 // pred_fallthru
      _
    // Predicated region
    $region46: #{tpu_custom_call.1} parent=1 // pred_check
      _
    $region47: #{tpu_custom_call.1} parent=1 // pred_check_branch
      %73 = sbr.rel (0) target = $region49
    $region48: #{tpu_custom_call.1} parent=1 // pred_region
      %74 = dma.done [#allocation6], 128
    $region49: #{tpu_custom_call.1} parent=1 // pred_fallthru
      _
    %v76 = vld [vmem:[%s0] sm:$0xf]
    %v77 = vld [vmem:[%s0 + $0x4] sm:$0xf]
    %v78 = vld [vmem:[%s0 + $0x8] sm:$0xf]
    %v79 = vld [vmem:[%s1] sm:$0xf]
    %v80 = vld [vmem:[%s1 + $0x4] sm:$0xf]
    %v81 = vld [vmem:[%s1 + $0x8] sm:$0xf]
    %v82 = vld [vmem:[#allocation2] sm:$0x7]
    %v86 = vunpack.c.l.b16 %v79
    %v87 = vunpack.c.l.b16 %v80
    %v88 = vunpack.c.l.b16 %v81
    %v89 = vpack.c.b16 %v87, %v86
    %v90 = vpack.c.b16 %v88, %v88
    %vm91 = vcmask 48128
    %v93 = vsel %vm91, %v89, 0
    %v96 = vsel %vm91, %v90, 0
    %vm98 = vcmask 1042432
    %v100 = vsel %vm98, %v82, 0
    %102 = vmatprep.subr.bf16.mxu0 0
    %103 = vmatpush1.bf16.msra.mxu0 %v100
    %104 = vmatprep.subr.bf16.mxu0 0
    %105 = vmatpush1.bf16.msra.mxu0 0
    %106 = vmatprep.subr.bf16.mxu0 0
    %107 = vmatpush1.bf16.msra.mxu0 0
    %108 = vmatprep.subr.bf16.mxu0 0
    %109 = vmatpush1.bf16.msra.mxu0 0
    %110 = vmatprep.subr.bf16.mxu0 0
    %111 = vmatpush1.bf16.msra.mxu0 0
    %112 = vmatprep.subr.bf16.mxu0 0
    %113 = vmatpush1.bf16.msra.mxu0 0
    %114 = vmatprep.subr.bf16.mxu0 0
    %115 = vmatpush1.bf16.msra.mxu0 0
    %116 = vmatprep.subr.bf16.mxu0 0
    %117 = vmatpush1.bf16.msra.mxu0 0
    %118 = vmatprep.subr.bf16.mxu0 0
    %119 = vmatpush1.bf16.msra.mxu0 0
    %120 = vmatprep.subr.bf16.mxu0 0
    %121 = vmatpush1.bf16.msra.mxu0 0
    %122 = vmatprep.subr.bf16.mxu0 0
    %123 = vmatpush1.bf16.msra.mxu0 0
    %124 = vmatprep.subr.bf16.mxu0 0
    %125 = vmatpush1.bf16.msra.mxu0 0
    %126 = vmatprep.subr.bf16.mxu0 0
    %127 = vmatpush1.bf16.msra.mxu0 0
    %128 = vmatprep.subr.bf16.mxu0 0
    %129 = vmatpush1.bf16.msra.mxu0 0
    %130 = vmatprep.subr.bf16.mxu0 0
    %131 = vmatpush1.bf16.msra.mxu0 0
    %132 = vmatprep.subr.bf16.mxu0 0
    %133 = vmatpush1.bf16.msra.mxu0 0
    %134 = vmatprep.mubr.bf16.mxu0 0
    %135 = vmatmul.mubr.bf16.gmra.mrb[0].mxu0 %v93
    %v136 = vpop.f32.mrb[0].mxu0
    %v137 = vadd.f32 0.0, %v136
    %v138 = vpop.f32.mrb[0].mxu0
    %v139 = vpop.f32.mrb[0].mxu0
    %v140 = vadd.f32 0.0, %v139
    %v141 = vpop.f32.mrb[0].mxu0
    %142 = vmatprep.mubr.bf16.mxu0 0
    %143 = vmatmul.mubr.bf16.gmra.mrb[0].mxu0 %v96
    %v144 = vpop.f32.mrb[0].mxu0
    %v145 = vadd.f32 0.0, %v144
    %v146 = vpop.f32.mrb[0].mxu0
    %v147 = vpop.f32.mrb[0].mxu0
    %v148 = vpop.f32.mrb[0].mxu0
    %149 = vdwg.mxu0
    %v150 = vmul.f32 %v137, %v137
    %v151 = vmul.f32 %v140, %v140
    %v152 = vmul.f32 %v145, %v145
    %v153 = vlaneseq
    %v154 = vshrl.u32 %v153, 7
    %v155 = vadd.s32 %v154, 8
    %v156 = vadd.s32 %v154, 16
    %v157 = vadd.s32 %v154, 24
    %v158 = vadd.s32 %v154, 32
    %v159 = vadd.s32 %v154, 40
    %vm160 = vcmp.lt.s32.totalorder %v154, 0
    %v161 = vsub.s32 0, %v154
    %v162 = vsel %vm160, %v161, %v154
    %v163 = vshrl.u32 %v162, 4
    %v164 = vand.u32 %v162, 15
    %v165 = vsub.s32 0, %v164
    %v166 = vsel %vm160, %v165, %v164
    %vm167 = vcmp.lt.s32.totalorder %v155, 0
    %v168 = vsub.s32 0, %v155
    %v169 = vsel %vm167, %v168, %v155
    %v170 = vshrl.u32 %v169, 4
    %v171 = vand.u32 %v169, 15
    %v172 = vsub.s32 0, %v171
    %v173 = vsel %vm167, %v172, %v171
    %vm174 = vcmp.lt.s32.totalorder %v156, 0
    %v175 = vsub.s32 0, %v156
    %v176 = vsel %vm174, %v175, %v156
    %v177 = vshrl.u32 %v176, 4
    %v178 = vand.u32 %v176, 15
    %v179 = vsub.s32 0, %v178
    %v180 = vsel %vm174, %v179, %v178
    %vm181 = vcmp.lt.s32.totalorder %v157, 0
    %v182 = vsub.s32 0, %v157
    %v183 = vsel %vm181, %v182, %v157
    %v184 = vshrl.u32 %v183, 4
    %v185 = vand.u32 %v183, 15
    %v186 = vsub.s32 0, %v185
    %v187 = vsel %vm181, %v186, %v185
    %vm188 = vcmp.lt.s32.totalorder %v158, 0
    %v189 = vsub.s32 0, %v158
    %v190 = vsel %vm188, %v189, %v158
    %v191 = vshrl.u32 %v190, 4
    %v192 = vand.u32 %v190, 15
    %v193 = vsub.s32 0, %v192
    %v194 = vsel %vm188, %v193, %v192
    %vm195 = vcmp.lt.s32.totalorder %v159, 0
    %v196 = vsub.s32 0, %v159
    %v197 = vsel %vm195, %v196, %v159
    %v198 = vshrl.u32 %v197, 4
    %v199 = vand.u32 %v197, 15
    %v200 = vsub.s32 0, %v199
    %v201 = vsel %vm195, %v200, %v199
    %vm202 = vcmp.ne.s32.totalorder %v166, 0
    %vm203 = vcmp.ne.s32.totalorder %v173, 0
    %vm204 = vcmp.ne.s32.totalorder %v180, 0
    %vm205 = vcmp.ne.s32.totalorder %v187, 0
    %vm206 = vcmp.ne.s32.totalorder %v194, 0
    %vm207 = vcmp.ne.s32.totalorder %v201, 0
    %vm208 = vcmp.lt.s32.totalorder %v166, 0
    %vm209 = vcmp.lt.s32.totalorder %v173, 0
    %vm210 = vcmp.lt.s32.totalorder %v180, 0
    %vm211 = vcmp.lt.s32.totalorder %v187, 0
    %vm212 = vcmp.lt.s32.totalorder %v194, 0
    %vm213 = vcmp.lt.s32.totalorder %v201, 0
    %vm214 = vmand %vm208, %vm202
    %vm215 = vmand %vm209, %vm203
    %vm216 = vmand %vm210, %vm204
    %vm217 = vmand %vm211, %vm205
    %vm218 = vmand %vm212, %vm206
    %vm219 = vmand %vm213, %vm207
    %v220 = vadd.s32 %v166, 16
    %v221 = vadd.s32 %v173, 16
    %v222 = vadd.s32 %v180, 16
    %v223 = vadd.s32 %v187, 16
    %v224 = vadd.s32 %v194, 16
    %v225 = vadd.s32 %v201, 16
    %v226 = vsel %vm214, %v220, %v166
    %v227 = vsel %vm215, %v221, %v173
    %v228 = vsel %vm216, %v222, %v180
    %v229 = vsel %vm217, %v223, %v187
    %v230 = vsel %vm218, %v224, %v194
    %v231 = vsel %vm219, %v225, %v201
    %v232 = vlaneseq
    %v233 = vand.u32 %v232, 127
    %vm234 = vcmp.eq.s32.totalorder %v226, %v233
    %vm235 = vcmp.eq.s32.totalorder %v227, %v233
    %vm236 = vcmp.eq.s32.totalorder %v228, %v233
    %vm237 = vcmp.eq.s32.totalorder %v229, %v233
    %vm238 = vcmp.eq.s32.totalorder %v230, %v233
    %vm239 = vcmp.eq.s32.totalorder %v231, %v233
    %v240 = vsel %vm234, 1, 0
    %v241 = vsel %vm235, 1, 0
    %v242 = vsel %vm236, 1, 0
    %v243 = vsel %vm237, 1, 0
    %v244 = vsel %vm238, 1, 0
    %v245 = vsel %vm239, 1, 0
    %v246 = vcvt.s32.f32 %v240
    %v247 = vcvt.s32.f32 %v241
    %v248 = vcvt.s32.f32 %v242
    %v249 = vcvt.s32.f32 %v243
    %v250 = vcvt.s32.f32 %v244
    %v251 = vcvt.s32.f32 %v245
    %vm252 = vcmask 392192
    %v254 = vsel %vm252, %v150, 0
    %v257 = vsel %vm252, %v151, 0
    %v260 = vsel %vm252, %v152, 0
    %262 = vmatprep.subr.mxu0 0.0
    %263 = vmatpush1.msra.mxu0 %v246
    %264 = vmatprep.subr.mxu0 0.0
    %265 = vmatpush1.msra.mxu0 %v247
    %266 = vmatprep.subr.mxu0 0.0
    %267 = vmatpush1.msra.mxu0 %v248
    %268 = vmatprep.subr.mxu0 0.0
    %269 = vmatpush1.msra.mxu0 %v249
    %270 = vmatprep.subr.mxu0 0.0
    %271 = vmatpush1.msra.mxu0 %v250
    %272 = vmatprep.subr.mxu0 0.0
    %273 = vmatpush1.msra.mxu0 %v251
    %274 = vmatprep.subr.mxu0 0.0
    %275 = vmatpush1.msra.mxu0 0.0
    %276 = vmatprep.subr.mxu0 0.0
    %277 = vmatpush1.msra.mxu0 0.0
    %278 = vmatprep.subr.mxu0 0.0
    %279 = vmatpush1.msra.mxu0 0.0
    %280 = vmatprep.subr.mxu0 0.0
    %281 = vmatpush1.msra.mxu0 0.0
    %282 = vmatprep.subr.mxu0 0.0
    %283 = vmatpush1.msra.mxu0 0.0
    %284 = vmatprep.subr.mxu0 0.0
    %285 = vmatpush1.msra.mxu0 0.0
    %286 = vmatprep.subr.mxu0 0.0
    %287 = vmatpush1.msra.mxu0 0.0
    %288 = vmatprep.subr.mxu0 0.0
    %289 = vmatpush1.msra.mxu0 0.0
    %290 = vmatprep.subr.mxu0 0.0
    %291 = vmatpush1.msra.mxu0 0.0
    %292 = vmatprep.subr.mxu0 0.0
    %293 = vmatpush1.msra.mxu0 0.0
    %294 = vmatprep.subr.mxu0 0.0
    %295 = vmatpush1.msra.mxu0 0.0
    %296 = vmatprep.subr.mxu0 0.0
    %297 = vmatpush1.msra.mxu0 0.0
    %298 = vmatprep.subr.mxu0 0.0
    %299 = vmatpush1.msra.mxu0 0.0
    %300 = vmatprep.subr.mxu0 0.0
    %301 = vmatpush1.msra.mxu0 0.0
    %302 = vmatprep.subr.mxu0 0.0
    %303 = vmatpush1.msra.mxu0 0.0
    %304 = vmatprep.subr.mxu0 0.0
    %305 = vmatpush1.msra.mxu0 0.0
    %306 = vmatprep.subr.mxu0 0.0
    %307 = vmatpush1.msra.mxu0 0.0
    %308 = vmatprep.subr.mxu0 0.0
    %309 = vmatpush1.msra.mxu0 0.0
    %310 = vmatprep.subr.mxu0 0.0
    %311 = vmatpush1.msra.mxu0 0.0
    %312 = vmatprep.subr.mxu0 0.0
    %313 = vmatpush1.msra.mxu0 0.0
    %314 = vmatprep.subr.mxu0 0.0
    %315 = vmatpush1.msra.mxu0 0.0
    %316 = vmatprep.subr.mxu0 0.0
    %317 = vmatpush1.msra.mxu0 0.0
    %318 = vmatprep.subr.mxu0 0.0
    %319 = vmatpush1.msra.mxu0 0.0
    %320 = vmatprep.subr.mxu0 0.0
    %321 = vmatpush1.msra.mxu0 0.0
    %322 = vmatprep.subr.mxu0 0.0
    %323 = vmatpush1.msra.mxu0 0.0
    %324 = vmatprep.subr.mxu0 0.0
    %325 = vmatpush1.msra.mxu0 0.0
    %326 = vmatprep.mubr.f32.mxu0 0.0
    %327 = vmatmul.mubr.f32.gmra.mrb[0].mxu0 %v254
    %v328 = vpop.f32.mrb[0].mxu0
    %v329 = vadd.f32 0.0, %v328
    %v330 = vpop.f32.mrb[0].mxu0
    %331 = vmatprep.mubr.f32.mxu0 0.0
    %332 = vmatmul.mubr.f32.gmra.mrb[0].mxu0 %v257
    %v333 = vpop.f32.mrb[0].mxu0
    %v334 = vadd.f32 0.0, %v333
    %v335 = vpop.f32.mrb[0].mxu0
    %336 = vmatprep.mubr.f32.mxu0 0.0
    %337 = vmatmul.mubr.f32.gmra.mrb[0].mxu0 %v260
    %v338 = vpop.f32.mrb[0].mxu0
    %v339 = vadd.f32 0.0, %v338
    %v340 = vpop.f32.mrb[0].mxu0
    %341 = vdwg.mxu0
    %v342 = vmax.f32 %v329, 1e-08
    %v343 = vmax.f32 %v334, 1e-08
    %v344 = vmax.f32 %v339, 1e-08
    %v345 = vrsqrt.pop %v342
    %v346 = vmul.f32 %v342, %v345
    %vm347 = vcmp.eq.f32.partialorder %v342, inf
    %v348 = vsel %vm347, %v342, %v346
    %vm349 = vcmp.eq.f32.partialorder %v342, 0.0
    %v350 = vand.u32 %v342, 2147483648
    %v351 = vsel %vm349, %v350, %v348
    %v352 = vrsqrt.pop %v343
    %v353 = vmul.f32 %v343, %v352
    %vm354 = vcmp.eq.f32.partialorder %v343, inf
    %v355 = vsel %vm354, %v343, %v353
    %vm356 = vcmp.eq.f32.partialorder %v343, 0.0
    %v357 = vand.u32 %v343, 2147483648
    %v358 = vsel %vm356, %v357, %v355
    %v359 = vrsqrt.pop %v344
    %v360 = vmul.f32 %v344, %v359
    %vm361 = vcmp.eq.f32.partialorder %v344, inf
    %v362 = vsel %vm361, %v344, %v360
    %vm363 = vcmp.eq.f32.partialorder %v344, 0.0
    %v364 = vand.u32 %v344, 2147483648
    %v365 = vsel %vm363, %v364, %v362
    %v366 = vld [vmem:[#allocation5] sm:$0xf]
    %v367 = vld [vmem:[#allocation5 + $0x4] sm:$0xf]
    %v368 = vld [vmem:[#allocation5 + $0x8] sm:$0xf]
    %v369 = vld [vmem:[#allocation5 + $0xc] sm:$0xf]
    %v370 = vld [vmem:[#allocation5 + $0x10] sm:$0xf]
    %v371 = vld [vmem:[#allocation5 + $0x14] sm:$0xf]
    %v372 = vld [vmem:[#allocation5 + $0x18] sm:$0xf]
    %v373 = vld [vmem:[#allocation5 + $0x1c] sm:$0xf]
    %v374 = vld [vmem:[#allocation5 + $0x20] sm:$0xf]
    %v375 = vld [vmem:[#allocation5 + $0x24] sm:$0xf]
    %v376 = vld [vmem:[#allocation5 + $0x28] sm:$0xf]
    %v377 = vld [vmem:[#allocation5 + $0x2c] sm:$0xf]
    %v378 = vld [vmem:[#allocation5 + $0x30] sm:$0xf]
    %v379 = vld [vmem:[#allocation5 + $0x34] sm:$0xf]
    %v380 = vld [vmem:[#allocation5 + $0x38] sm:$0xf]
    %v381 = vld [vmem:[#allocation5 + $0x3c] sm:$0xf]
    %v382 = vpack.c.bf16 %v358, %v351
    %v383 = vpack.c.bf16 %v365, %v365
    %v384 = vld [vmem:[#allocation7] sm:$0xf]
    %v385 = vld [vmem:[#allocation7 + $0x4] sm:$0xf]
    %v388 = vunpack.c.l.b16 %v384
    %v389 = vunpack.c.l.b16 %v385
    %v390 = vpack.c.b16 %v389, %v388
    %vm392 = vcmask 130048
    %v394 = vsel %vm392, %v382, 0
    %v397 = vsel %vm392, %v383, 0
    %399 = vmatprep.subr.bf16.mxu0 0
    %400 = vmatpush1.bf16.msra.mxu0 %v390
    %401 = vmatprep.subr.bf16.mxu0 0
    %402 = vmatpush1.bf16.msra.mxu0 0
    %403 = vmatprep.subr.bf16.mxu0 0
    %404 = vmatpush1.bf16.msra.mxu0 0
    %405 = vmatprep.subr.bf16.mxu0 0
    %406 = vmatpush1.bf16.msra.mxu0 0
    %407 = vmatprep.subr.bf16.mxu0 0
    %408 = vmatpush1.bf16.msra.mxu0 0
    %409 = vmatprep.subr.bf16.mxu0 0
    %410 = vmatpush1.bf16.msra.mxu0 0
    %411 = vmatprep.subr.bf16.mxu0 0
    %412 = vmatpush1.bf16.msra.mxu0 0
    %413 = vmatprep.subr.bf16.mxu0 0
    %414 = vmatpush1.bf16.msra.mxu0 0
    %415 = vmatprep.subr.bf16.mxu0 0
    %416 = vmatpush1.bf16.msra.mxu0 0
    %417 = vmatprep.subr.bf16.mxu0 0
    %418 = vmatpush1.bf16.msra.mxu0 0
    %419 = vmatprep.subr.bf16.mxu0 0
    %420 = vmatpush1.bf16.msra.mxu0 0
    %421 = vmatprep.subr.bf16.mxu0 0
    %422 = vmatpush1.bf16.msra.mxu0 0
    %423 = vmatprep.subr.bf16.mxu0 0
    %424 = vmatpush1.bf16.msra.mxu0 0
    %425 = vmatprep.subr.bf16.mxu0 0
    %426 = vmatpush1.bf16.msra.mxu0 0
    %427 = vmatprep.subr.bf16.mxu0 0
    %428 = vmatpush1.bf16.msra.mxu0 0
    %429 = vmatprep.subr.bf16.mxu0 0
    %430 = vmatpush1.bf16.msra.mxu0 0
    %431 = vmatprep.mubr.bf16.mxu0 0
    %432 = vmatmul.mubr.bf16.gmra.mrb[0].mxu0 %v394
    %v433 = vpop.f32.mrb[0].mxu0
    %v434 = vadd.f32 0.0, %v433
    %v435 = vpop.f32.mrb[0].mxu0
    %v436 = vpop.f32.mrb[0].mxu0
    %v437 = vadd.f32 0.0, %v436
    %v438 = vpop.f32.mrb[0].mxu0
    %439 = vmatprep.mubr.bf16.mxu0 0
    %440 = vmatmul.mubr.bf16.gmra.mrb[0].mxu0 %v397
    %v441 = vpop.f32.mrb[0].mxu0
    %v442 = vadd.f32 0.0, %v441
    %v443 = vpop.f32.mrb[0].mxu0
    %v444 = vpop.f32.mrb[0].mxu0
    %v445 = vpop.f32.mrb[0].mxu0
    %446 = vdwg.mxu0
    %v450 = vunpack.c.l.b16 %v76
    %v451 = vunpack.c.l.b16 %v77
    %v452 = vunpack.c.l.b16 %v78
    %v453 = vpack.c.b16 %v451, %v450
    %v454 = vpack.c.b16 %v452, %v452
    %v473 = vunpack.c.l.b16 %v366
    %v474 = vunpack.c.l.b16 %v367
    %v475 = vunpack.c.l.b16 %v368
    %v476 = vunpack.c.l.b16 %v369
    %v477 = vunpack.c.l.b16 %v370
    %v478 = vunpack.c.l.b16 %v371
    %v479 = vunpack.c.l.b16 %v372
    %v480 = vunpack.c.l.b16 %v373
    %v481 = vunpack.c.l.b16 %v374
    %v482 = vunpack.c.l.b16 %v375
    %v483 = vunpack.c.l.b16 %v376
    %v484 = vunpack.c.l.b16 %v377
    %v485 = vunpack.c.l.b16 %v378
    %v486 = vunpack.c.l.b16 %v379
    %v487 = vunpack.c.l.b16 %v380
    %v488 = vunpack.c.l.b16 %v381
    %v489 = vpack.c.b16 %v474, %v473
    %v490 = vpack.c.b16 %v476, %v475
    %v491 = vpack.c.b16 %v478, %v477
    %v492 = vpack.c.b16 %v480, %v479
    %v493 = vpack.c.b16 %v482, %v481
    %v494 = vpack.c.b16 %v484, %v483
    %v495 = vpack.c.b16 %v486, %v485
    %v496 = vpack.c.b16 %v488, %v487
    %505 = vmatprep.subr.bf16.mxu0 0
    %506 = vmatpush1.bf16.msra.mxu0 %v489
    %507 = vmatprep.subr.bf16.mxu0 0
    %508 = vmatpush1.bf16.msra.mxu0 %v490
    %509 = vmatprep.subr.bf16.mxu0 0
    %510 = vmatpush1.bf16.msra.mxu0 %v491
    %511 = vmatprep.subr.bf16.mxu0 0
    %512 = vmatpush1.bf16.msra.mxu0 %v492
    %513 = vmatprep.subr.bf16.mxu0 0
    %514 = vmatpush1.bf16.msra.mxu0 %v493
    %515 = vmatprep.subr.bf16.mxu0 0
    %516 = vmatpush1.bf16.msra.mxu0 %v494
    %517 = vmatprep.subr.bf16.mxu0 0
    %518 = vmatpush1.bf16.msra.mxu0 %v495
    %519 = vmatprep.subr.bf16.mxu0 0
    %520 = vmatpush1.bf16.msra.mxu0 %v496
    %521 = vmatprep.subr.bf16.mxu0 0
    %522 = vmatpush1.bf16.msra.mxu0 0
    %523 = vmatprep.subr.bf16.mxu0 0
    %524 = vmatpush1.bf16.msra.mxu0 0
    %525 = vmatprep.subr.bf16.mxu0 0
    %526 = vmatpush1.bf16.msra.mxu0 0
    %527 = vmatprep.subr.bf16.mxu0 0
    %528 = vmatpush1.bf16.msra.mxu0 0
    %529 = vmatprep.subr.bf16.mxu0 0
    %530 = vmatpush1.bf16.msra.mxu0 0
    %531 = vmatprep.subr.bf16.mxu0 0
    %532 = vmatpush1.bf16.msra.mxu0 0
    %533 = vmatprep.subr.bf16.mxu0 0
    %534 = vmatpush1.bf16.msra.mxu0 0
    %535 = vmatprep.subr.bf16.mxu0 0
    %536 = vmatpush1.bf16.msra.mxu0 0
    %537 = vmatprep.mubr.bf16.mxu0 0
    %538 = vmatmul.mubr.bf16.gmra.mrb[0].mxu0 %v453
    %v539 = vpop.f32.mrb[0].mxu0
    %v540 = vadd.f32 %v434, %v539
    %v541 = vpop.f32.mrb[0].mxu0
    %v542 = vpop.f32.mrb[0].mxu0
    %v543 = vadd.f32 %v437, %v542
    %v544 = vpop.f32.mrb[0].mxu0
    %545 = vmatprep.mubr.bf16.mxu0 0
    %546 = vmatmul.mubr.bf16.gmra.mrb[0].mxu0 %v454
    %v547 = vpop.f32.mrb[0].mxu0
    %v548 = vadd.f32 %v442, %v547
    %v549 = vpop.f32.mrb[0].mxu0
    %v550 = vpop.f32.mrb[0].mxu0
    %v551 = vpop.f32.mrb[0].mxu0
    %552 = vdwg.mxu0
    %v553 = vld [vmem:[%s5] sm:$0x1]
    %v555 = vlaneseq
    %v556 = vshrl.u32 %v555, 7
    %v557 = vsub.s32 0, %v556
    %v558 = vrot.slane %v553, %v557
    %v560 = vadd.f32 %v540, %v558
    %v561 = vadd.f32 %v543, %v558
    %v562 = vadd.f32 %v548, %v558
    %v563 = vpack.c.bf16 %v140, %v137
    %v564 = vpack.c.bf16 %v145, %v145
    %v565 = vld [vmem:[%s6] sm:$0xf]
    %v566 = vld [vmem:[%s6 + $0x4] sm:$0xf]
    %v567 = vld [vmem:[%s6 + $0x8] sm:$0xf]
    %v568 = vld [vmem:[%s6 + $0xc] sm:$0xf]
    %v569 = vld [vmem:[%s6 + $0x10] sm:$0xf]
    %v570 = vld [vmem:[%s6 + $0x14] sm:$0xf]
    %v577 = vunpack.c.l.b16 %v565
    %v578 = vunpack.c.l.b16 %v566
    %v579 = vunpack.c.l.b16 %v567
    %v580 = vunpack.c.l.b16 %v568
    %v581 = vunpack.c.l.b16 %v569
    %v582 = vunpack.c.l.b16 %v570
    %v583 = vpack.c.b16 %v578, %v577
    %v584 = vpack.c.b16 %v580, %v579
    %v585 = vpack.c.b16 %v582, %v581
    %v590 = vsel %vm252, %v563, 0
    %v593 = vsel %vm252, %v564, 0
    %595 = vmatprep.subr.bf16.mxu0 0
    %596 = vmatpush1.bf16.msra.mxu0 %v583
    %597 = vmatprep.subr.bf16.mxu0 0
    %598 = vmatpush1.bf16.msra.mxu0 %v584
    %599 = vmatprep.subr.bf16.mxu0 0
    %600 = vmatpush1.bf16.msra.mxu0 %v585
    %601 = vmatprep.subr.bf16.mxu0 0
    %602 = vmatpush1.bf16.msra.mxu0 0
    %603 = vmatprep.subr.bf16.mxu0 0
    %604 = vmatpush1.bf16.msra.mxu0 0
    %605 = vmatprep.subr.bf16.mxu0 0
    %606 = vmatpush1.bf16.msra.mxu0 0
    %607 = vmatprep.subr.bf16.mxu0 0
    %608 = vmatpush1.bf16.msra.mxu0 0
    %609 = vmatprep.subr.bf16.mxu0 0
    %610 = vmatpush1.bf16.msra.mxu0 0
    %611 = vmatprep.subr.bf16.mxu0 0
    %612 = vmatpush1.bf16.msra.mxu0 0
    %613 = vmatprep.subr.bf16.mxu0 0
    %614 = vmatpush1.bf16.msra.mxu0 0
    %615 = vmatprep.subr.bf16.mxu0 0
    %616 = vmatpush1.bf16.msra.mxu0 0
    %617 = vmatprep.subr.bf16.mxu0 0
    %618 = vmatpush1.bf16.msra.mxu0 0
    %619 = vmatprep.subr.bf16.mxu0 0
    %620 = vmatpush1.bf16.msra.mxu0 0
    %621 = vmatprep.subr.bf16.mxu0 0
    %622 = vmatpush1.bf16.msra.mxu0 0
    %623 = vmatprep.subr.bf16.mxu0 0
    %624 = vmatpush1.bf16.msra.mxu0 0
    %625 = vmatprep.subr.bf16.mxu0 0
    %626 = vmatpush1.bf16.msra.mxu0 0
    %627 = vmatprep.mubr.bf16.mxu0 0
    %628 = vmatmul.mubr.bf16.gmra.mrb[0].mxu0 %v590
    %v629 = vpop.f32.mrb[0].mxu0
    %v630 = vadd.f32 0.0, %v629
    %v631 = vpop.f32.mrb[0].mxu0
    %v632 = vpop.f32.mrb[0].mxu0
    %v633 = vadd.f32 0.0, %v632
    %v634 = vpop.f32.mrb[0].mxu0
    %635 = vmatprep.mubr.bf16.mxu0 0
    %636 = vmatmul.mubr.bf16.gmra.mrb[0].mxu0 %v593
    %v637 = vpop.f32.mrb[0].mxu0
    %v638 = vadd.f32 0.0, %v637
    %v639 = vpop.f32.mrb[0].mxu0
    %v640 = vpop.f32.mrb[0].mxu0
    %v641 = vpop.f32.mrb[0].mxu0
    %642 = vdwg.mxu0
    %v643 = vld [vmem:[%s7] sm:$0x1]
    %v644 = vld [vmem:[%s8] sm:$0x1]
    %645 = vadd.xlane.f32.xlu0 %v560
    %v646 = vpop.xlane.xlu0 %645
    %647 = vadd.xlane.f32.xlu0 %v561
    %v648 = vpop.xlane.xlu0 %647
    %649 = vadd.xlane.f32.xlu0 %v562
    %v650 = vpop.xlane.xlu0 %649
    %v651 = vrcp.pop 128.0
    %v652 = vmul.f32 %v646, %v651
    %v653 = vmul.f32 %v648, %v651
    %v654 = vmul.f32 %v650, %v651
    %v655 = vsub.f32 %v560, %v652
    %v656 = vsub.f32 %v561, %v653
    %v657 = vsub.f32 %v562, %v654
    %v658 = vmul.f32 %v655, %v655
    %v659 = vmul.f32 %v656, %v656
    %v660 = vmul.f32 %v657, %v657
    %661 = vadd.xlane.f32.xlu0 %v658
    %v662 = vpop.xlane.xlu0 %661
    %663 = vadd.xlane.f32.xlu0 %v659
    %v664 = vpop.xlane.xlu0 %663
    %665 = vadd.xlane.f32.xlu0 %v660
    %v666 = vpop.xlane.xlu0 %665
    %v667 = vmul.f32 %v662, %v651
    %v668 = vmul.f32 %v664, %v651
    %v669 = vmul.f32 %v666, %v651
    %v670 = vadd.f32 %v667, 1e-05
    %v671 = vadd.f32 %v668, 1e-05
    %v672 = vadd.f32 %v669, 1e-05
    %v673 = vrsqrt.pop %v670
    %v674 = vrsqrt.pop %v671
    %v675 = vrsqrt.pop %v672
    %v676 = vmul.f32 %v655, %v673
    %v677 = vmul.f32 %v656, %v674
    %v678 = vmul.f32 %v657, %v675
    %v680 = vlaneseq
    %v681 = vshrl.u32 %v680, 7
    %v682 = vsub.s32 0, %v681
    %v683 = vrot.slane %v643, %v682
    %v685 = vmul.f32 %v676, %v683
    %v686 = vmul.f32 %v677, %v683
    %v687 = vmul.f32 %v678, %v683
    %v689 = vlaneseq
    %v690 = vshrl.u32 %v689, 7
    %v691 = vsub.s32 0, %v690
    %v692 = vrot.slane %v644, %v691
    %v694 = vadd.f32 %v685, %v692
    %v695 = vadd.f32 %v686, %v692
    %v696 = vadd.f32 %v687, %v692
    %v697 = vmul.f32 %v630, %v630
    %v698 = vmul.f32 %v633, %v633
    %v699 = vmul.f32 %v638, %v638
    %v701 = vsel %vm252, %v697, 0
    %v704 = vsel %vm252, %v698, 0
    %v707 = vsel %vm252, %v699, 0
    %709 = vmatprep.subr.mxu0 0.0
    %710 = vmatpush1.msra.mxu0 %v246
    %711 = vmatprep.subr.mxu0 0.0
    %712 = vmatpush1.msra.mxu0 %v247
    %713 = vmatprep.subr.mxu0 0.0
    %714 = vmatpush1.msra.mxu0 %v248
    %715 = vmatprep.subr.mxu0 0.0
    %716 = vmatpush1.msra.mxu0 %v249
    %717 = vmatprep.subr.mxu0 0.0
    %718 = vmatpush1.msra.mxu0 %v250
    %719 = vmatprep.subr.mxu0 0.0
    %720 = vmatpush1.msra.mxu0 %v251
    %721 = vmatprep.subr.mxu0 0.0
    %722 = vmatpush1.msra.mxu0 0.0
    %723 = vmatprep.subr.mxu0 0.0
    %724 = vmatpush1.msra.mxu0 0.0
    %725 = vmatprep.subr.mxu0 0.0
    %726 = vmatpush1.msra.mxu0 0.0
    %727 = vmatprep.subr.mxu0 0.0
    %728 = vmatpush1.msra.mxu0 0.0
    %729 = vmatprep.subr.mxu0 0.0
    %730 = vmatpush1.msra.mxu0 0.0
    %731 = vmatprep.subr.mxu0 0.0
    %732 = vmatpush1.msra.mxu0 0.0
    %733 = vmatprep.subr.mxu0 0.0
    %734 = vmatpush1.msra.mxu0 0.0
    %735 = vmatprep.subr.mxu0 0.0
    %736 = vmatpush1.msra.mxu0 0.0
    %737 = vmatprep.subr.mxu0 0.0
    %738 = vmatpush1.msra.mxu0 0.0
    %739 = vmatprep.subr.mxu0 0.0
    %740 = vmatpush1.msra.mxu0 0.0
    %741 = vmatprep.subr.mxu0 0.0
    %742 = vmatpush1.msra.mxu0 0.0
    %743 = vmatprep.subr.mxu0 0.0
    %744 = vmatpush1.msra.mxu0 0.0
    %745 = vmatprep.subr.mxu0 0.0
    %746 = vmatpush1.msra.mxu0 0.0
    %747 = vmatprep.subr.mxu0 0.0
    %748 = vmatpush1.msra.mxu0 0.0
    %749 = vmatprep.subr.mxu0 0.0
    %750 = vmatpush1.msra.mxu0 0.0
    %751 = vmatprep.subr.mxu0 0.0
    %752 = vmatpush1.msra.mxu0 0.0
    %753 = vmatprep.subr.mxu0 0.0
    %754 = vmatpush1.msra.mxu0 0.0
    %755 = vmatprep.subr.mxu0 0.0
    %756 = vmatpush1.msra.mxu0 0.0
    %757 = vmatprep.subr.mxu0 0.0
    %758 = vmatpush1.msra.mxu0 0.0
    %759 = vmatprep.subr.mxu0 0.0
    %760 = vmatpush1.msra.mxu0 0.0
    %761 = vmatprep.subr.mxu0 0.0
    %762 = vmatpush1.msra.mxu0 0.0
    %763 = vmatprep.subr.mxu0 0.0
    %764 = vmatpush1.msra.mxu0 0.0
    %765 = vmatprep.subr.mxu0 0.0
    %766 = vmatpush1.msra.mxu0 0.0
    %767 = vmatprep.subr.mxu0 0.0
    %768 = vmatpush1.msra.mxu0 0.0
    %769 = vmatprep.subr.mxu0 0.0
    %770 = vmatpush1.msra.mxu0 0.0
    %771 = vmatprep.subr.mxu0 0.0
    %772 = vmatpush1.msra.mxu0 0.0
    %773 = vmatprep.mubr.f32.mxu0 0.0
    %774 = vmatmul.mubr.f32.gmra.mrb[0].mxu0 %v701
    %v775 = vpop.f32.mrb[0].mxu0
    %v776 = vadd.f32 0.0, %v775
    %v777 = vpop.f32.mrb[0].mxu0
    %778 = vmatprep.mubr.f32.mxu0 0.0
    %779 = vmatmul.mubr.f32.gmra.mrb[0].mxu0 %v704
    %v780 = vpop.f32.mrb[0].mxu0
    %v781 = vadd.f32 0.0, %v780
    %v782 = vpop.f32.mrb[0].mxu0
    %783 = vmatprep.mubr.f32.mxu0 0.0
    %784 = vmatmul.mubr.f32.gmra.mrb[0].mxu0 %v707
    %v785 = vpop.f32.mrb[0].mxu0
    %v786 = vadd.f32 0.0, %v785
    %v787 = vpop.f32.mrb[0].mxu0
    %788 = vdwg.mxu0
    %v789 = vmax.f32 %v776, 1e-08
    %v790 = vmax.f32 %v781, 1e-08
    %v791 = vmax.f32 %v786, 1e-08
    %v792 = vsel %vm392, %v789, 0.0
    %793 = vadd.xlane.f32.xlu0 %v792
    %v794 = vpop.xlane.xlu0 %793
    %v795 = vsel %vm392, %v790, 0.0
    %796 = vadd.xlane.f32.xlu0 %v795
    %v797 = vpop.xlane.xlu0 %796
    %v798 = vsel %vm392, %v791, 0.0
    %799 = vadd.xlane.f32.xlu0 %v798
    %v800 = vpop.xlane.xlu0 %799
    %v801 = vrcp.pop 16.0
    %v802 = vmul.f32 %v794, %v801
    %v803 = vmul.f32 %v797, %v801
    %v804 = vmul.f32 %v800, %v801
    %v805 = vrsqrt.pop %v802
    %v806 = vrsqrt.pop %v803
    %v807 = vrsqrt.pop %v804
    %v808 = vmul.f32 %v630, %v805
    %v809 = vmul.f32 %v633, %v806
    %v810 = vmul.f32 %v638, %v807
    %v811 = vpack.c.bf16 %v695, %v694
    %v812 = vpack.c.bf16 %v696, %v696
    %v815 = vunpack.c.l.b16 %v811
    %v816 = vunpack.c.h.b16 %v811
    %v817 = vunpack.c.l.b16 %v812
    %v818 = vpack.c.b16 %v815, %v815
    %v819 = vpack.c.b16 %v816, %v816
    %v820 = vpack.c.b16 %v817, %v817
    %824 = vst [vmem:[#allocation8] sm:$0xf] %v818
    %825 = vst [vmem:[#allocation8 + $0x4] sm:$0xf] %v819
    %826 = vst [vmem:[#allocation8 + $0x8] sm:$0xf] %v820
    %v827 = vpack.c.bf16 %v809, %v808
    %v828 = vpack.c.bf16 %v810, %v810
    %v831 = vunpack.c.l.b16 %v827
    %v832 = vunpack.c.h.b16 %v827
    %v833 = vunpack.c.l.b16 %v828
    %v834 = vpack.c.b16 %v831, %v831
    %v835 = vpack.c.b16 %v832, %v832
    %v836 = vpack.c.b16 %v833, %v833
    %vm840 = vcmask 388096
    %841 = vst.msk [vmem:[#allocation9] sm:$0xf] %vm840, %v834
    %842 = vst.msk [vmem:[#allocation9 + $0x4] sm:$0xf] %vm840, %v835
    %843 = vst.msk [vmem:[#allocation9 + $0x8] sm:$0xf] %vm840, %v836
    // Predicated region
    $region50: #{tpu_custom_call.1} parent=1 // pred_check
      _
    $region51: #{tpu_custom_call.1} parent=1 // pred_check_branch
      %845 = sbr.rel (0) target = $region53
    $region52: #{tpu_custom_call.1} parent=1 // pred_region
      %s847 = ssub.s32 192, 192
      %848 = vsyncadd [#allocation4], %s847
      %s849 = sshll.u32 [#allocation8], 4
      %s850 = int_to_ptr.vmem [resolvable:$true] %s849
      %855 = dma.vmem_to_hbm [thread:$0]  %s850, 192, %s9, [#allocation4], 64, 64, 4
    $region53: #{tpu_custom_call.1} parent=1 // pred_fallthru
      _
    // Predicated region
    $region54: #{tpu_custom_call.1} parent=1 // pred_check
      _
    $region55: #{tpu_custom_call.1} parent=1 // pred_check_branch
      %857 = sbr.rel (0) target = $region57
    $region56: #{tpu_custom_call.1} parent=1 // pred_region
      %s859 = ssub.s32 192, 192
      %860 = vsyncadd [#allocation10], %s859
      %s861 = sshll.u32 [#allocation9], 4
      %s862 = int_to_ptr.vmem [resolvable:$true] %s861
      %867 = dma.vmem_to_hbm [thread:$0]  %s862, 192, %s10, [#allocation10], 64, 64, 4
    $region57: #{tpu_custom_call.1} parent=1 // pred_fallthru
      _
    // Predicated region
    $region58: #{tpu_custom_call.1} parent=1 // pred_check
      _
    $region59: #{tpu_custom_call.1} parent=1 // pred_check_branch
      %869 = sbr.rel (0) target = $region61
    $region60: #{tpu_custom_call.1} parent=1 // pred_region
      %870 = dma.done [#allocation4], 192
    $region61: #{tpu_custom_call.1} parent=1 // pred_fallthru
      _
    // Predicated region
    $region62: #{tpu_custom_call.1} parent=1 // pred_check
      _
    $region63: #{tpu_custom_call.1} parent=1 // pred_check_branch
      %872 = sbr.rel (0) target = $region65
    $region64: #{tpu_custom_call.1} parent=1 // pred_region
      %873 = dma.done [#allocation10], 192
    $region65: #{tpu_custom_call.1} parent=1 // pred_fallthru
      _
    %874 = vsyncpa [#allocation3], 1
    %875 = vsyncpa [#allocation6], 1
    %876 = vsyncpa [#allocation4], 1
    %877 = vsyncpa [#allocation10], 1

</llo_original>
